<compile_context>
chip_gen: v7x
topology: tpu7x:2x2x1
jax: 0.10.0
libtpu: 0.0.40
codegen_flags: <defaults>
</compile_context>

<pallas_src>
from typing import NamedTuple, Optional

import jax
import jax.numpy as jnp
from jax.experimental import pallas as pl
from jax.experimental.pallas import tpu as pltpu


# ---------------------------------------------------------------------------
# Kernels
# ---------------------------------------------------------------------------
def ia3_kernel_direct_f32(x_ref, w_ref, bs_ref, o_ref):
    """f32 output: accumulate straight into the VMEM-resident output block.

    x_ref : (tm, tk) bf16  input rows tile
    w_ref : (tk, tn) bf16  weight tile, already in (K, N) layout
    bs_ref: (2,  tn) f32   row 0 = bias, row 1 = multi_lora_b
    o_ref : (tm, tn) f32   output tile (block index constant over k)
    """
    k = pl.program_id(2)

    @pl.when(k == 0)
    def _():
        o_ref[...] = jnp.zeros_like(o_ref)

    o_ref[...] += jnp.dot(x_ref[...], w_ref[...],
                          preferred_element_type=jnp.float32)

    @pl.when(k == pl.num_programs(2) - 1)
    def _():
        o_ref[...] = (o_ref[...] + bs_ref[0:1, :]) * bs_ref[1:2, :]


def ia3_kernel_acc(x_ref, w_ref, bs_ref, o_ref, acc_ref):
    """Generic output dtype: f32 VMEM scratch accumulator, cast at the end."""
    k = pl.program_id(2)

    @pl.when(k == 0)
    def _():
        acc_ref[...] = jnp.zeros_like(acc_ref)

    acc_ref[...] += jnp.dot(x_ref[...], w_ref[...],
                            preferred_element_type=jnp.float32)

    @pl.when(k == pl.num_programs(2) - 1)
    def _():
        h = (acc_ref[...] + bs_ref[0:1, :]) * bs_ref[1:2, :]
        o_ref[...] = h.astype(o_ref.dtype)


# ---------------------------------------------------------------------------
# Wrapper
# ---------------------------------------------------------------------------
def _round_up(x, m):
    return ((x + m - 1) // m) * m


class IA3Params(NamedTuple):
    w_kn: jax.Array        # (Kp, Np) bf16: weight.T, zero-padded
    bias_scale: jax.Array  # (2, Np) f32: row 0 bias, row 1 multi_lora_b
    in_features: int
    out_features: int
    tk: int
    tn: int


def prepare_ia3_params(weight, bias, multi_lora_b, *, tn=256, tk=2048):
    """One-time parameter prep: transpose, pad, bf16-cast the weight and pack
    bias/scale.  Do this once per layer, NOT per forward call."""
    out_features, in_features = weight.shape

    tn_e = min(tn, _round_up(out_features, 128))
    tk_e = min(tk, _round_up(in_features, 128))
    Np = _round_up(out_features, tn_e)
    Kp = _round_up(in_features, tk_e)

    # (out, in) -> (in, out) once, so the kernel does a standard MXU dot.
    w_kn = jnp.pad(weight.T,
                   ((0, Kp - in_features), (0, Np - out_features))
                   ).astype(jnp.bfloat16)

    if bias is None:
        bias = jnp.zeros((out_features,), jnp.float32)
    bias_scale = jnp.stack(
        [jnp.pad(bias.astype(jnp.float32), (0, Np - out_features)),
         jnp.pad(multi_lora_b.astype(jnp.float32), (0, Np - out_features))],
        axis=0)  # (2, Np)

    return IA3Params(w_kn=w_kn, bias_scale=bias_scale,
                     in_features=in_features, out_features=out_features,
                     tk=tk_e, tn=tn_e)


def ia3_linear_apply(x, params: IA3Params, *, tm=512):
    """hidden = (x @ W.T + b) * multi_lora_b, using prepared params."""
    in_features = params.in_features
    out_features = params.out_features
    tk_e, tn_e = params.tk, params.tn
    Kp, Np = params.w_kn.shape

    lead_shape = x.shape[:-1]
    out_dtype = x.dtype

    x2d = x.reshape(-1, in_features)
    M = x2d.shape[0]

    # --- adaptive M tiling (avoid padding up to a full tm on the tail) -----
    Mp8 = _round_up(max(M, 1), 8)
    num_n = Np // tn_e
    num_m = -(-Mp8 // tm)
    if num_m * num_n == 1 and Mp8 >= 16:
        # Expose at least two (i, j) tiles so v7x's second TensorCore has work.
        num_m = 2
    tm_e = _round_up(-(-Mp8 // num_m), 8)
    Mp = tm_e * num_m

    # Zero padding of M/K contributes nothing (padded K cols of x meet padded
    # K rows of W); padded rows/cols are sliced off afterwards.
    xb = jnp.pad(x2d, ((0, Mp - M), (0, Kp - in_features))).astype(jnp.bfloat16)

    num_k = Kp // tk_e
    grid = (num_m, num_n, num_k)

    direct = jnp.dtype(out_dtype) == jnp.float32
    kernel = ia3_kernel_direct_f32 if direct else ia3_kernel_acc
    scratch = [] if direct else [pltpu.VMEM((tm_e, tn_e), jnp.float32)]

    # VMEM budget: double-buffered inputs/outputs (+ optional acc scratch),
    # with 1.5x headroom, floored at 16 MiB and capped below v7x's 64 MiB/TC.
    out_bytes = jnp.dtype(out_dtype).itemsize
    est_vmem = (2 * tm_e * tk_e * 2            # x tiles (bf16, double-buffered)
                + 2 * tk_e * tn_e * 2          # w tiles
                + 2 * 2 * tn_e * 4             # bias/scale tiles
                + 2 * tm_e * tn_e * out_bytes  # output tiles
                + (0 if direct else tm_e * tn_e * 4))
    vmem_limit = int(min(max(est_vmem * 3 // 2, 16 * 1024 * 1024),
                         48 * 1024 * 1024))

    out = pl.pallas_call(
        kernel,
        out_shape=jax.ShapeDtypeStruct((Mp, Np), out_dtype),
        grid_spec=pltpu.PrefetchScalarGridSpec(
            num_scalar_prefetch=0,
            grid=grid,
            in_specs=[
                pl.BlockSpec((tm_e, tk_e), lambda i, j, k: (i, k)),  # x
                pl.BlockSpec((tk_e, tn_e), lambda i, j, k: (k, j)),  # W^T (K,N)
                pl.BlockSpec((2, tn_e), lambda i, j, k: (0, j)),     # [bias; scale]
            ],
            out_specs=pl.BlockSpec((tm_e, tn_e), lambda i, j, k: (i, j)),
            scratch_shapes=scratch,
        ),
        compiler_params=pltpu.CompilerParams(
            dimension_semantics=("parallel", "parallel", "arbitrary"),
            vmem_limit_bytes=vmem_limit,
        ),
    )(xb, params.w_kn, params.bias_scale)

    out = out[:M, :out_features]
    return out.reshape(*lead_shape, out_features)


def ia3_linear(x, weight, bias, multi_lora_b, *, tm=512, tn=256, tk=2048):
    """Convenience one-shot wrapper.  In a real model call prepare_ia3_params
    once per layer and reuse the result across forward passes."""
    params = prepare_ia3_params(weight, bias, multi_lora_b, tn=tn, tk=tk)
    return ia3_linear_apply(x, params, tm=tm)


# ---------------------------------------------------------------------------
# Self-test
# ---------------------------------------------------------------------------
if __name__ == "__main__":
    # Small shapes consistent with an nn.Linear inside a transformer block:
    # batch=2, seq=8, in_features=32, out_features=64
    batch, seq, in_features, out_features = 2, 8, 32, 64

    key = jax.random.PRNGKey(0)
    kx, kw, kb = jax.random.split(key, 3)

    x = jax.random.normal(kx, (batch, seq, in_features), dtype=jnp.float32)
    weight = jax.random.normal(kw, (out_features, in_features),
                               dtype=jnp.float32) * (1.0 / jnp.sqrt(in_features))
    bias = jax.random.normal(kb, (out_features,), dtype=jnp.float32) * 0.01
    # IA3Linear initializes multi_lora_b to ones
    multi_lora_b = jnp.ones((out_features,), dtype=jnp.float32)

    # Prepare once (weight transpose/pad/bf16 cast hoisted out of the hot
    # path), then run the kernel.
    params = prepare_ia3_params(weight, bias, multi_lora_b)
    out = ia3_linear_apply(x, params)
    out = jax.block_until_ready(out)

    # Reference in plain JAX (same semantics as F.linear * scale).  Operands
    # are fed to the MXU in bf16 (f32 accumulation), so tolerances reflect
    # bf16 input rounding.
    ref = (jnp.einsum("bsi,oi->bso", x, weight) + bias) * multi_lora_b
    assert out.shape == (batch, seq, out_features)
    assert jnp.allclose(out, ref, atol=3e-2, rtol=3e-2), \
        float(jnp.max(jnp.abs(out - ref)))

    print("KERNEL_OK")
</pallas_src>

<mosaic_0001>
module attributes {stable_mosaic.version = 11 : i64} {
  func.func @ia3_kernel_direct_f32(%arg0: i32, %arg1: i32, %arg2: i32, %arg3: memref<8x128xbf16, #tpu.memory_space<vmem>>, %arg4: memref<128x128xbf16, #tpu.memory_space<vmem>>, %arg5: memref<2x128xf32, #tpu.memory_space<vmem>>, %arg6: memref<8x128xf32, #tpu.memory_space<vmem>>) attributes {dimension_semantics = [#tpu.dimension_semantics<parallel>, #tpu.dimension_semantics<parallel>, #tpu.dimension_semantics<arbitrary>], iteration_bounds = array<i64: 2, 1, 1>, scalar_prefetch = 0 : i64, scratch_operands = 0 : i64, tpu.core_type = #tpu.core_type<tc>, window_params = [{transform_indices = @transform_0, window_bounds = array<i64: 8, 128>}, {transform_indices = @transform_1, window_bounds = array<i64: 128, 128>}, {transform_indices = @transform_2, window_bounds = array<i64: 2, 128>}, {transform_indices = @transform_3, window_bounds = array<i64: 8, 128>}]} {
    %c0_i32 = arith.constant 0 : i32
    %0 = arith.cmpi eq, %arg2, %c0_i32 : i32
    %1 = arith.extui %0 : i1 to i32
    %c0_i32_0 = arith.constant 0 : i32
    %2 = arith.cmpi ne, %1, %c0_i32_0 : i32
    scf.if %2 {
      %cst_10 = arith.constant 0.000000e+00 : f32
      %12 = vector.broadcast %cst_10 : f32 to vector<8x128xf32>
      %c0_11 = arith.constant 0 : index
      %c0_12 = arith.constant 0 : index
      %13 = vector.load %arg6[%c0_11, %c0_12] : memref<8x128xf32, #tpu.memory_space<vmem>>, vector<8x128xf32>
      tpu.vector_store %arg6[%c0_11, %c0_12], %12 {strides = array<i32>} : memref<8x128xf32, #tpu.memory_space<vmem>>, vector<8x128xf32>,
    } else {
    }
    %c0 = arith.constant 0 : index
    %c0_1 = arith.constant 0 : index
    %3 = vector.load %arg6[%c0, %c0_1] : memref<8x128xf32, #tpu.memory_space<vmem>>, vector<8x128xf32>
    %c0_2 = arith.constant 0 : index
    %c0_3 = arith.constant 0 : index
    %4 = vector.load %arg3[%c0_2, %c0_3] : memref<8x128xbf16, #tpu.memory_space<vmem>>, vector<8x128xbf16>
    %c0_4 = arith.constant 0 : index
    %c0_5 = arith.constant 0 : index
    %5 = vector.load %arg4[%c0_4, %c0_5] : memref<128x128xbf16, #tpu.memory_space<vmem>>, vector<128x128xbf16>
    %cst = arith.constant dense<0.000000e+00> : vector<8x128xf32>
    %6 = tpu.matmul %4, %5, %cst {dimension_numbers = #tpu.dot_dimension_numbers<[1], [0], [0], [1], [0, 0, 1, 1], [], []>} : vector<8x128xbf16>, vector<128x128xbf16>, vector<8x128xf32> -> vector<8x128xf32>
    %7 = arith.addf %3, %6 : vector<8x128xf32>
    %c0_6 = arith.constant 0 : index
    %c0_7 = arith.constant 0 : index
    %8 = vector.load %arg6[%c0_6, %c0_7] : memref<8x128xf32, #tpu.memory_space<vmem>>, vector<8x128xf32>
    tpu.vector_store %arg6[%c0_6, %c0_7], %7 {strides = array<i32>} : memref<8x128xf32, #tpu.memory_space<vmem>>, vector<8x128xf32>,
    %c0_i32_8 = arith.constant 0 : i32
    %9 = arith.cmpi eq, %arg2, %c0_i32_8 : i32
    %10 = arith.extui %9 : i1 to i32
    %c0_i32_9 = arith.constant 0 : i32
    %11 = arith.cmpi ne, %10, %c0_i32_9 : i32
    scf.if %11 {
      %c0_10 = arith.constant 0 : index
      %c0_11 = arith.constant 0 : index
      %12 = vector.load %arg6[%c0_10, %c0_11] : memref<8x128xf32, #tpu.memory_space<vmem>>, vector<8x128xf32>
      %c0_12 = arith.constant 0 : index
      %c0_13 = arith.constant 0 : index
      %13 = vector.load %arg5[%c0_12, %c0_13] : memref<2x128xf32, #tpu.memory_space<vmem>>, vector<1x128xf32>
      %14 = vector.broadcast %13 : vector<1x128xf32> to vector<8x128xf32>
      %15 = arith.addf %12, %14 : vector<8x128xf32>
      %c1 = arith.constant 1 : index
      %c0_14 = arith.constant 0 : index
      %16 = vector.load %arg5[%c1, %c0_14] : memref<2x128xf32, #tpu.memory_space<vmem>>, vector<1x128xf32>
      %17 = vector.broadcast %16 : vector<1x128xf32> to vector<8x128xf32>
      %18 = arith.mulf %15, %17 : vector<8x128xf32>
      %c0_15 = arith.constant 0 : index
      %c0_16 = arith.constant 0 : index
      %19 = vector.load %arg6[%c0_15, %c0_16] : memref<8x128xf32, #tpu.memory_space<vmem>>, vector<8x128xf32>
      tpu.vector_store %arg6[%c0_15, %c0_16], %18 {strides = array<i32>} : memref<8x128xf32, #tpu.memory_space<vmem>>, vector<8x128xf32>,
    } else {
    }
    return
  }
  func.func @transform_0(%arg0: i32, %arg1: i32, %arg2: i32) -> (i32, i32) {
    %c0_i32 = arith.constant 0 : i32
    return %arg0, %arg2 : i32, i32
  }
  func.func @transform_1(%arg0: i32, %arg1: i32, %arg2: i32) -> (i32, i32) {
    %c0_i32 = arith.constant 0 : i32
    return %arg2, %arg1 : i32, i32
  }
  func.func @transform_2(%arg0: i32, %arg1: i32, %arg2: i32) -> (i32, i32) {
    %c0_i32 = arith.constant 0 : i32
    %c0_i32_0 = arith.constant 0 : i32
    return %c0_i32, %arg1 : i32, i32
  }
  func.func @transform_3(%arg0: i32, %arg1: i32, %arg2: i32) -> (i32, i32) {
    %c0_i32 = arith.constant 0 : i32
    return %arg0, %arg1 : i32, i32
  }
}

</mosaic_0001>

<llo_original>
// kernel: tpu_custom_call.1
$region0: #{tpu_custom_call.1}
  #allocation0 [shape = 'u32[]', space=smem, size = 0x4, offset = 0x4, fixed_abs, tag = 'smem constant byte address 0x4 - core index']
  #allocation1 [shape = 'u32[144,128]{1,0:T(1,128)}', space=vmem, size = 0x12000, scoped, tag = 'internal scratch']
  %s0 = inlined_call_operand.hbm [shape: bf16[16,128], index: 0, kind: input, shape index: {}]
  %s1 = inlined_call_operand.hbm [shape: bf16[128,128], index: 1, kind: input, shape index: {}]
  %s2 = inlined_call_operand.vmem [shape: f32[2,128], index: 2, kind: input, shape index: {}]
  %s3 = inlined_call_operand.hbm [shape: f32[16,128], index: 3, kind: output, shape index: {}]
  %s4 = sld [smem:[#allocation0]]
  $region61: #{tpu_custom_call.1} parent=0
    _
  %s6 = ssub.s32 1, %s4
  %s7 = scalar_select 0, %s6, %s4
  $region1: #{tpu_custom_call.1} parent=0
    #allocation2 [shape = 'u8[4096]{0}', space=vmem, size = 0x1000, scoped, tag = 'input window, operand 0']
    #allocation3 [shape = 's32[2]{0}', space=sflag, size = 0x8, scoped, tag = 'scoped memory for tpu_custom_call.1']
    #allocation4 [shape = 's32[2]{0}', space=sflag, size = 0x8, scoped, tag = 'scoped memory for tpu_custom_call.1']
    #allocation5 [shape = 'u8[32768]{0}', space=vmem, size = 0x8000, scoped, tag = 'input window, operand 1, single buffered']
    #allocation6 [shape = 's32[1]{0}', space=sflag, size = 0x4, scoped, tag = 'scoped memory for tpu_custom_call.1']
    #allocation7 [shape = 'u8[8192]{0}', space=vmem, size = 0x2000, scoped, tag = 'output window, operand 0']
    %8 = vsyncpa [#allocation3], 0
    %s9 = scalar_lea.sflag [#allocation3], 1
    %10 = vsyncpa %s9, 0
    %11 = vsyncpa [#allocation6], 0
    %12 = vsyncpa [#allocation4], 0
    %s13 = scalar_lea.sflag [#allocation4], 1
    %14 = vsyncpa %s13, 0
    loop: start=0, step=1, limit=4
    $region2: #{tpu_custom_call.1} parent=1 // loop_pre_header
      _
    $region3: #{tpu_custom_call.1} parent=1 // loop_header
      %s16 = sphi 0, %s20
      %p17 = scmp.ge.s32.totalorder %s16, 4
      %s23 = sphi 0, %s42
      %s24 = sphi 0, %s38
      %s25 = sphi 0, %s34
      %s26 = sphi 0, %s23
      %s27 = sphi 0, %s24
      %s28 = sphi 0, %s25
      %s29 = sphi 0, %s26
      %s30 = sphi 0, %s27
      %s31 = sphi 0, %s28
      %s47 = sphi 0, %s49
      %s50 = sphi 0, %s47
      %s51 = sphi 0, %s50
      %s67 = sphi 0, %s51
      %s75 = sphi 0, %s77
      %s78 = sphi 0, %s75
      %s79 = sphi 0, %s78
      %s95 = sphi 0, %s79
      %s101 = sphi 0, %s103
      %s104 = sphi 0, %s101
      %s105 = sphi 0, %s104
      %s121 = sphi 0, %s105
      %s129 = sphi 0, %s131
      %s132 = sphi 0, %s129
      %s133 = sphi 0, %s132
      %s149 = sphi 0, %s133
    $region4: #{tpu_custom_call.1} parent=1 // loop_header_branch
      %19 = sbr.rel (%p17) target = $region8
    $region5: #{tpu_custom_call.1} parent=1 // loop_body
      %s21 = ssub.s32 %s16, 1
      %s22 = ssub.s32 %s16, 2
      %s32 = sadd.s32 1, %s25
      %p33 = scmp.ge.s32.totalorder %s32, 1
      %s34 = scalar_select %p33, 0, %s32
      %s35 = sadd.s32 1, %s24
      %s36 = scalar_select %p33, %s35, %s24
      %p37 = scmp.ge.s32.totalorder %s36, 1
      %s38 = scalar_select %p37, 0, %s36
      %s39 = sadd.s32 1, %s23
      %s40 = scalar_select %p37, %s39, %s23
      %p41 = scmp.ge.s32.totalorder %s40, 2
      %s42 = scalar_select %p41, 0, %s40
      %s43 = ssub.s32 %s23, %s42
      %s44 = ssub.s32 %s25, %s34
      %s45 = sor.u32 %s43, %s44
      %p46 = scmp.eq.s32.totalorder %s45, 0
      %s48 = sadd.s32 %s47, 1
      %s49 = scalar_select %p46, %s47, %s48
      %p52 = pneg %p46
      %p53 = scmp.eq.s32.totalorder %s16, 1
      %p54 = por %p52, %p53
      %p55 = scmp.ne.s32.totalorder %s47, %s50
      %p56 = scmp.eq.s32.totalorder %s16, 0
      %p57 = por %p55, %p56
      %p58 = scmp.ne.s32.totalorder %s47, %s50
      %p59 = scmp.eq.s32.totalorder %s21, 1
      %p60 = por %p58, %p59
      %p61 = scmp.ne.s32.totalorder %s50, %s51
      %p62 = scmp.eq.s32.totalorder %s21, 0
      %p63 = por %p61, %p62
      %p64 = scmp.ne.s32.totalorder %s50, %s51
      %p65 = scmp.eq.s32.totalorder %s22, 1
      %p66 = por %p64, %p65
      %p68 = scmp.ne.s32.totalorder %s51, %s67
      %p69 = scmp.eq.s32.totalorder %s22, 0
      %p70 = por %p68, %p69
      %s71 = ssub.s32 %s25, %s34
      %s72 = ssub.s32 %s24, %s38
      %s73 = sor.u32 %s71, %s72
      %p74 = scmp.eq.s32.totalorder %s73, 0
      %s76 = sadd.s32 %s75, 1
      %s77 = scalar_select %p74, %s75, %s76
      %p80 = pneg %p74
      %p81 = scmp.eq.s32.totalorder %s16, 1
      %p82 = por %p80, %p81
      %p83 = scmp.ne.s32.totalorder %s75, %s78
      %p84 = scmp.eq.s32.totalorder %s16, 0
      %p85 = por %p83, %p84
      %p86 = scmp.ne.s32.totalorder %s75, %s78
      %p87 = scmp.eq.s32.totalorder %s21, 1
      %p88 = por %p86, %p87
      %p89 = scmp.ne.s32.totalorder %s78, %s79
      %p90 = scmp.eq.s32.totalorder %s21, 0
      %p91 = por %p89, %p90
      %p92 = scmp.ne.s32.totalorder %s78, %s79
      %p93 = scmp.eq.s32.totalorder %s22, 1
      %p94 = por %p92, %p93
      %p96 = scmp.ne.s32.totalorder %s79, %s95
      %p97 = scmp.eq.s32.totalorder %s22, 0
      %p98 = por %p96, %p97
      %s99 = ssub.s32 %s24, %s38
      %p100 = scmp.eq.s32.totalorder %s99, 0
      %s102 = sadd.s32 %s101, 1
      %s103 = scalar_select %p100, %s101, %s102
      %p106 = pneg %p100
      %p107 = scmp.eq.s32.totalorder %s16, 1
      %p108 = por %p106, %p107
      %p109 = scmp.ne.s32.totalorder %s101, %s104
      %p110 = scmp.eq.s32.totalorder %s16, 0
      %p111 = por %p109, %p110
      %p112 = scmp.ne.s32.totalorder %s101, %s104
      %p113 = scmp.eq.s32.totalorder %s21, 1
      %p114 = por %p112, %p113
      %p115 = scmp.ne.s32.totalorder %s104, %s105
      %p116 = scmp.eq.s32.totalorder %s21, 0
      %p117 = por %p115, %p116
      %p118 = scmp.ne.s32.totalorder %s104, %s105
      %p119 = scmp.eq.s32.totalorder %s22, 1
      %p120 = por %p118, %p119
      %p122 = scmp.ne.s32.totalorder %s105, %s121
      %p123 = scmp.eq.s32.totalorder %s22, 0
      %p124 = por %p122, %p123
      %s125 = ssub.s32 %s23, %s42
      %s126 = ssub.s32 %s24, %s38
      %s127 = sor.u32 %s125, %s126
      %p128 = scmp.eq.s32.totalorder %s127, 0
      %s130 = sadd.s32 %s129, 1
      %s131 = scalar_select %p128, %s129, %s130
      %p134 = pneg %p128
      %p135 = scmp.eq.s32.totalorder %s16, 1
      %p136 = por %p134, %p135
      %p137 = scmp.ne.s32.totalorder %s129, %s132
      %p138 = scmp.eq.s32.totalorder %s16, 0
      %p139 = por %p137, %p138
      %p140 = scmp.ne.s32.totalorder %s129, %s132
      %p141 = scmp.eq.s32.totalorder %s21, 1
      %p142 = por %p140, %p141
      %p143 = scmp.ne.s32.totalorder %s132, %s133
      %p144 = scmp.eq.s32.totalorder %s21, 0
      %p145 = por %p143, %p144
      %p146 = scmp.ne.s32.totalorder %s132, %s133
      %p147 = scmp.eq.s32.totalorder %s22, 1
      %p148 = por %p146, %p147
      %p150 = scmp.ne.s32.totalorder %s133, %s149
      %p151 = scmp.eq.s32.totalorder %s22, 0
      %p152 = por %p150, %p151
      %p153 = scmp.le.s32.totalorder 1, %s16
      %p154 = scmp.lt.s32.totalorder %s16, 3
      %p155 = pnand %p153, %p154
      %p156 = pneg %p155
      // Predicated region
      $region9: #{tpu_custom_call.1} parent=5 // pred_check
        _
      $region10: #{tpu_custom_call.1} parent=5 // pred_check_branch
        %158 = sbr.rel (%p155) target = $region12
      $region11: #{tpu_custom_call.1} parent=5 // pred_region
        %s159 = ssub.s32 %s16, 1
        // Predicated region
        $region13: #{tpu_custom_call.1} parent=11 // pred_check
          %p160 = pneg %p91
        $region14: #{tpu_custom_call.1} parent=11 // pred_check_branch
          %162 = sbr.rel (%p160) target = $region16
        $region15: #{tpu_custom_call.1} parent=11 // pred_region
          %s163 = smul.u32 16, %s28
          %s165 = ssub.s32 1024, 1024
          %166 = vsyncadd [#allocation6], %s165
          %s167 = sadd.s32 %s27, %s163
          %s168 = smul.addr %s167, 64
          %s169 = scalar_lea.hbm %s1, %s168
          %s170 = sshll.u32 [#allocation5], 4
          %s171 = int_to_ptr.vmem [resolvable:$true] %s170
          %176 = dma.hbm_to_vmem [thread:$0]  %s169, 1024, %s171, [#allocation6], 64, 64, 4
        $region16: #{tpu_custom_call.1} parent=11 // pred_fallthru
          _
        // Predicated region
        $region17: #{tpu_custom_call.1} parent=11 // pred_check
          %p177 = pneg %p117
        $region18: #{tpu_custom_call.1} parent=11 // pred_check_branch
          %179 = sbr.rel (%p177) target = $region20
        $region19: #{tpu_custom_call.1} parent=11 // pred_region
          %p180 = scmp.lt.s32.totalorder %s27, 0
          %s181 = scalar_select %p180, %s27, 0
          %s182 = smul.addr %s181, 2
          %s183 = scalar_lea.vmem %s2, %s182
        $region20: #{tpu_custom_call.1} parent=11 // pred_fallthru
          _
      $region12: #{tpu_custom_call.1} parent=5 // pred_fallthru
        _
      %p184 = scmp.lt.s32.totalorder %s16, 2
      // Predicated region
      $region21: #{tpu_custom_call.1} parent=5 // pred_check
        %p185 = pneg %p184
      $region22: #{tpu_custom_call.1} parent=5 // pred_check_branch
        %187 = sbr.rel (%p185) target = $region24
      $region23: #{tpu_custom_call.1} parent=5 // pred_region
        // Predicated region
        $region25: #{tpu_custom_call.1} parent=23 // pred_check
          %p188 = pneg %p57
        $region26: #{tpu_custom_call.1} parent=23 // pred_check_branch
          %190 = sbr.rel (%p188) target = $region28
        $region27: #{tpu_custom_call.1} parent=23 // pred_region
          %s191 = sand.u32 %s47, 1
          %s192 = scalar_lea.sflag [#allocation3], %s191
          %s193 = sand.u32 %s47, 1
          %s194 = smul.addr %s193, 4
          %s195 = scalar_lea.vmem [#allocation2], %s194
          %s197 = ssub.s32 64, 64
          %198 = vsyncadd %s192, %s197
          %s199 = sadd.s32 %s25, %s23
          %s200 = smul.addr %s199, 64
          %s201 = scalar_lea.hbm %s0, %s200
          %s203 = sshll.u32 %s195, 4
          %s204 = int_to_ptr.vmem [resolvable:$true] %s203
          %206 = dma.hbm_to_vmem [thread:$0]  %s201, 64, %s204, %s192
        $region28: #{tpu_custom_call.1} parent=23 // pred_fallthru
          _
      $region24: #{tpu_custom_call.1} parent=5 // pred_fallthru
        _
      %p207 = scmp.le.s32.totalorder 1, %s16
      %p208 = scmp.lt.s32.totalorder %s16, 3
      %p209 = pnand %p207, %p208
      %p210 = pneg %p209
      // Predicated region
      $region29: #{tpu_custom_call.1} parent=5 // pred_check
        _
      $region30: #{tpu_custom_call.1} parent=5 // pred_check_branch
        %212 = sbr.rel (%p209) target = $region32
      $region31: #{tpu_custom_call.1} parent=5 // pred_region
        %s213 = ssub.s32 %s16, 1
        %s214 = sand.u32 %s50, 1
        %s215 = scalar_lea.sflag [#allocation3], %s214
        %s216 = sand.u32 %s50, 1
        %s217 = smul.addr %s216, 4
        %s218 = scalar_lea.vmem [#allocation2], %s217
        // Predicated region
        $region33: #{tpu_custom_call.1} parent=31 // pred_check
          %p219 = pneg %p63
        $region34: #{tpu_custom_call.1} parent=31 // pred_check_branch
          %221 = sbr.rel (%p219) target = $region36
        $region35: #{tpu_custom_call.1} parent=31 // pred_region
          %222 = dma.done %s215, 64
        $region36: #{tpu_custom_call.1} parent=31 // pred_fallthru
          _
        // Predicated region
        $region37: #{tpu_custom_call.1} parent=31 // pred_check
          %p223 = pneg %p91
        $region38: #{tpu_custom_call.1} parent=31 // pred_check_branch
          %225 = sbr.rel (%p223) target = $region40
        $region39: #{tpu_custom_call.1} parent=31 // pred_region
          %226 = dma.done [#allocation6], 1024
        $region40: #{tpu_custom_call.1} parent=31 // pred_fallthru
          _
        %s227 = sand.u32 %s50, 1
        %s228 = scalar_lea.sflag [#allocation3], %s227
        %s229 = sand.u32 %s50, 1
        %s230 = smul.addr %s229, 4
        %s231 = scalar_lea.vmem [#allocation2], %s230
        %p232 = pneg %p63
        %p233 = pneg %p60
        %p234 = pneg %p91
        %p235 = pneg %p88
        %p236 = scmp.lt.s32.totalorder %s27, 0
        %s237 = scalar_select %p236, %s27, 0
        %s238 = smul.addr %s237, 2
        %s239 = scalar_lea.vmem %s2, %s238
        %p240 = pneg %p117
        %p241 = pneg %p114
        %p242 = pneg %p145
        %p243 = pneg %p142
        %s244 = sand.u32 %s132, 1
        %s245 = scalar_lea.sflag [#allocation4], %s244
        %s246 = sand.u32 %s132, 1
        %s247 = smul.addr %s246, 8
        %s248 = scalar_lea.vmem [#allocation7], %s247
        %s249 = smul.u32 16, %s28
        %p250 = scmp.lt.s32.totalorder %s27, 0
        %s251 = scalar_select %p250, %s27, 0
        %s252 = smul.addr %s251, 2
        %s253 = scalar_lea.vmem %s2, %s252
        %p255 = scmp.eq.s32.totalorder %s28, 0
        // Predicated region
        $region41: #{tpu_custom_call.1} parent=31 // pred_check
          %p256 = pneg %p255
        $region42: #{tpu_custom_call.1} parent=31 // pred_check_branch
          %258 = sbr.rel (%p256) target = $region44
        $region43: #{tpu_custom_call.1} parent=31 // pred_region
          %259 = vst [vmem:[%s248] sm:$0xff] 0.0
        $region44: #{tpu_custom_call.1} parent=31 // pred_fallthru
          _
        %v260 = vld [vmem:[%s248] sm:$0xff]
        %v261 = vld [vmem:[%s218] sm:$0xf]
        %v262 = vld [vmem:[#allocation5] sm:$0xf]
        %v263 = vld [vmem:[#allocation5 + $0x4] sm:$0xf]
        %v264 = vld [vmem:[#allocation5 + $0x8] sm:$0xf]
        %v265 = vld [vmem:[#allocation5 + $0xc] sm:$0xf]
        %v266 = vld [vmem:[#allocation5 + $0x10] sm:$0xf]
        %v267 = vld [vmem:[#allocation5 + $0x14] sm:$0xf]
        %v268 = vld [vmem:[#allocation5 + $0x18] sm:$0xf]
        %v269 = vld [vmem:[#allocation5 + $0x1c] sm:$0xf]
        %v270 = vld [vmem:[#allocation5 + $0x20] sm:$0xf]
        %v271 = vld [vmem:[#allocation5 + $0x24] sm:$0xf]
        %v272 = vld [vmem:[#allocation5 + $0x28] sm:$0xf]
        %v273 = vld [vmem:[#allocation5 + $0x2c] sm:$0xf]
        %v274 = vld [vmem:[#allocation5 + $0x30] sm:$0xf]
        %v275 = vld [vmem:[#allocation5 + $0x34] sm:$0xf]
        %v276 = vld [vmem:[#allocation5 + $0x38] sm:$0xf]
        %v277 = vld [vmem:[#allocation5 + $0x3c] sm:$0xf]
        %v294 = vunpack.c.l.b16 %v262
        %v295 = vunpack.c.l.b16 %v263
        %v296 = vunpack.c.l.b16 %v264
        %v297 = vunpack.c.l.b16 %v265
        %v298 = vunpack.c.l.b16 %v266
        %v299 = vunpack.c.l.b16 %v267
        %v300 = vunpack.c.l.b16 %v268
        %v301 = vunpack.c.l.b16 %v269
        %v302 = vunpack.c.l.b16 %v270
        %v303 = vunpack.c.l.b16 %v271
        %v304 = vunpack.c.l.b16 %v272
        %v305 = vunpack.c.l.b16 %v273
        %v306 = vunpack.c.l.b16 %v274
        %v307 = vunpack.c.l.b16 %v275
        %v308 = vunpack.c.l.b16 %v276
        %v309 = vunpack.c.l.b16 %v277
        %v310 = vpack.c.b16 %v295, %v294
        %v311 = vpack.c.b16 %v297, %v296
        %v312 = vpack.c.b16 %v299, %v298
        %v313 = vpack.c.b16 %v301, %v300
        %v314 = vpack.c.b16 %v303, %v302
        %v315 = vpack.c.b16 %v305, %v304
        %v316 = vpack.c.b16 %v307, %v306
        %v317 = vpack.c.b16 %v309, %v308
        %326 = vmatprep.subr.bf16.mxu0 0
        %327 = vmatpush1.bf16.msra.mxu0 %v310
        %328 = vmatprep.subr.bf16.mxu0 0
        %329 = vmatpush1.bf16.msra.mxu0 %v311
        %330 = vmatprep.subr.bf16.mxu0 0
        %331 = vmatpush1.bf16.msra.mxu0 %v312
        %332 = vmatprep.subr.bf16.mxu0 0
        %333 = vmatpush1.bf16.msra.mxu0 %v313
        %334 = vmatprep.subr.bf16.mxu0 0
        %335 = vmatpush1.bf16.msra.mxu0 %v314
        %336 = vmatprep.subr.bf16.mxu0 0
        %337 = vmatpush1.bf16.msra.mxu0 %v315
        %338 = vmatprep.subr.bf16.mxu0 0
        %339 = vmatpush1.bf16.msra.mxu0 %v316
        %340 = vmatprep.subr.bf16.mxu0 0
        %341 = vmatpush1.bf16.msra.mxu0 %v317
        %342 = vmatprep.subr.bf16.mxu0 0
        %343 = vmatpush1.bf16.msra.mxu0 0
        %344 = vmatprep.subr.bf16.mxu0 0
        %345 = vmatpush1.bf16.msra.mxu0 0
        %346 = vmatprep.subr.bf16.mxu0 0
        %347 = vmatpush1.bf16.msra.mxu0 0
        %348 = vmatprep.subr.bf16.mxu0 0
        %349 = vmatpush1.bf16.msra.mxu0 0
        %350 = vmatprep.subr.bf16.mxu0 0
        %351 = vmatpush1.bf16.msra.mxu0 0
        %352 = vmatprep.subr.bf16.mxu0 0
        %353 = vmatpush1.bf16.msra.mxu0 0
        %354 = vmatprep.subr.bf16.mxu0 0
        %355 = vmatpush1.bf16.msra.mxu0 0
        %356 = vmatprep.subr.bf16.mxu0 0
        %357 = vmatpush1.bf16.msra.mxu0 0
        %358 = vmatprep.mubr.bf16.mxu0 0
        %359 = vmatmul.mubr.bf16.gmra.mrb[0].mxu0 %v261
        %v360 = vpop.f32.mrb[0].mxu0
        %v361 = vadd.f32 0.0, %v360
        %v362 = vpop.f32.mrb[0].mxu0
        %v363 = vpop.f32.mrb[0].mxu0
        %v364 = vpop.f32.mrb[0].mxu0
        %365 = vdwg.mxu0
        %v366 = vadd.f32 %v260, %v361
        %367 = vst [vmem:[%s248] sm:$0xff] %v366
        // Predicated region
        $region45: #{tpu_custom_call.1} parent=31 // pred_check
          %p368 = pneg %p255
        $region46: #{tpu_custom_call.1} parent=31 // pred_check_branch
          %370 = sbr.rel (%p368) target = $region48
        $region47: #{tpu_custom_call.1} parent=31 // pred_region
          %v371 = vld [vmem:[%s248] sm:$0xff]
          %v372 = vld [vmem:[%s253] sm:$0x1]
          %v373 = vlaneseq
          %v374 = vshrl.u32 %v373, 7
          %v375 = vsub.s32 0, %v374
          %v376 = vrot.slane %v372, %v375
          %v377 = vadd.f32 %v371, %v376
          %v378 = vld [vmem:[%s253 + $0x1] sm:$0x1]
          %v379 = vlaneseq
          %v380 = vshrl.u32 %v379, 7
          %v381 = vsub.s32 0, %v380
          %v382 = vrot.slane %v378, %v381
          %v383 = vmul.f32 %v377, %v382
          %384 = vst [vmem:[%s248] sm:$0xff] %v383
        $region48: #{tpu_custom_call.1} parent=31 // pred_fallthru
          _
        %s385 = sand.u32 %s132, 1
        %s386 = scalar_lea.sflag [#allocation4], %s385
        %s387 = sand.u32 %s132, 1
        %s388 = smul.addr %s387, 8
        %s389 = scalar_lea.vmem [#allocation7], %s388
        // Predicated region
        $region49: #{tpu_custom_call.1} parent=31 // pred_check
          %p390 = pneg %p142
        $region50: #{tpu_custom_call.1} parent=31 // pred_check_branch
          %392 = sbr.rel (%p390) target = $region52
        $region51: #{tpu_custom_call.1} parent=31 // pred_region
          %s394 = ssub.s32 128, 128
          %395 = vsyncadd %s386, %s394
          %s396 = sadd.s32 %s27, %s26
          %s397 = smul.addr %s396, 128
          %s398 = scalar_lea.hbm %s3, %s397
          %s400 = sshll.u32 %s389, 4
          %s401 = int_to_ptr.vmem [resolvable:$true] %s400
          %403 = dma.vmem_to_hbm [thread:$0]  %s401, 128, %s398, %s386
        $region52: #{tpu_custom_call.1} parent=31 // pred_fallthru
          _
      $region32: #{tpu_custom_call.1} parent=5 // pred_fallthru
        _
      %p404 = scmp.le.s32.totalorder 2, %s16
      // Predicated region
      $region53: #{tpu_custom_call.1} parent=5 // pred_check
        %p405 = pneg %p404
      $region54: #{tpu_custom_call.1} parent=5 // pred_check_branch
        %407 = sbr.rel (%p405) target = $region56
      $region55: #{tpu_custom_call.1} parent=5 // pred_region
        %s408 = ssub.s32 %s16, 2
        // Predicated region
        $region57: #{tpu_custom_call.1} parent=55 // pred_check
          %p409 = pneg %p148
        $region58: #{tpu_custom_call.1} parent=55 // pred_check_branch
          %411 = sbr.rel (%p409) target = $region60
        $region59: #{tpu_custom_call.1} parent=55 // pred_region
          %s412 = sand.u32 %s133, 1
          %s413 = scalar_lea.sflag [#allocation4], %s412
          %s414 = sand.u32 %s133, 1
          %s415 = smul.addr %s414, 8
          %s416 = scalar_lea.vmem [#allocation7], %s415
          %417 = dma.done %s413, 128
        $region60: #{tpu_custom_call.1} parent=55 // pred_fallthru
          _
      $region56: #{tpu_custom_call.1} parent=5 // pred_fallthru
        _
    $region6: #{tpu_custom_call.1} parent=1 // loop_footer
      %s20 = sadd.s32 1, %s16
    $region7: #{tpu_custom_call.1} parent=1 // loop_footer_branch
      %15 = sbr.rel target = $region3
    $region8: #{tpu_custom_call.1} parent=1 // loop_exit
      _
    %418 = vsyncpa [#allocation3], 1
    %s419 = scalar_lea.sflag [#allocation3], 1
    %420 = vsyncpa %s419, 1
    %421 = vsyncpa [#allocation6], 1
    %422 = vsyncpa [#allocation4], 1
    %s423 = scalar_lea.sflag [#allocation4], 1
    %424 = vsyncpa %s423, 1

</llo_original>
